<compile_context>
chip_gen: v5e
topology: v5e:2x2
jax: 0.10.0
libtpu: 0.0.40
codegen_flags: <defaults>
</compile_context>

<pallas_src>
import functools

import jax
import jax.numpy as jnp
from jax.experimental import pallas as pl
from jax.experimental.pallas import tpu as pltpu


_TB_MAX = 1024  # batch row tile: multiple of 8 (sublanes) and 128 (lanes)


def _dropout_threshold(p):
    """uint32 threshold such that P(bits < thr) ~= p."""
    return min(int(float(p) * 4294967296.0), 4294967295)


# ----------------------------------------------------------------------------
# Kernels
# ----------------------------------------------------------------------------
def _linear_kernel(x_ref, w_ref, o_ref):
    """Eval mode: o[2, TB] = W[2, H] @ X[TB, H]^T  (dropout is identity)."""
    o_ref[...] = jax.lax.dot_general(
        w_ref[...], x_ref[...],
        dimension_numbers=(((1,), (1,)), ((), ())),   # contract H with H
        preferred_element_type=jnp.float32)


def _dropout_linear_kernel(x_ref, bits_ref, w_ref, o_ref, *, thr, inv_keep):
    """Train mode: inverted dropout (integer-threshold mask) then linear."""
    x = x_ref[...]                                     # [TB, H] f32
    bits = bits_ref[...]                               # [TB, H] u32
    scale = jnp.where(bits < jnp.uint32(thr),
                      jnp.float32(0.0), jnp.float32(inv_keep))
    xd = x * scale
    o_ref[...] = jax.lax.dot_general(
        w_ref[...], xd,
        dimension_numbers=(((1,), (1,)), ((), ())),
        preferred_element_type=jnp.float32)


# ----------------------------------------------------------------------------
# Wrapper
# ----------------------------------------------------------------------------
def primary_encoder_head_forward(pooled_cls, weight, bias, *,
                                 training=False, dropout_p=0.3, rng_key=None):
    """logits = label(pooler_dropout(pooled_cls)).

    pooled_cls : [B, H] float32
    weight     : [2, H] float32  (PyTorch nn.Linear layout, kept untransposed)
    bias       : [2]    float32
    returns    : [B, 2] float32
    """
    B, H = pooled_cls.shape
    num_labels = weight.shape[0]

    # Batch tile: single full block for small B, otherwise pad B up to a
    # multiple of the 1024-row tile so every block satisfies the (8,128) rule.
    if B <= _TB_MAX:
        tb, b_pad = B, B
    else:
        tb = _TB_MAX
        b_pad = pl.cdiv(B, tb) * tb

    x = pooled_cls.astype(jnp.float32)
    if b_pad != B:
        x = jnp.pad(x, ((0, b_pad - B), (0, 0)))      # zero rows -> zero cols out
    w = weight.astype(jnp.float32)

    grid = (b_pad // tb,)
    x_spec = pl.BlockSpec((tb, H), lambda i: (i, 0))
    w_spec = pl.BlockSpec((num_labels, H), lambda i: (0, 0))   # VMEM-resident
    o_spec = pl.BlockSpec((num_labels, tb), lambda i: (0, i))  # lane-dense out
    out_shape = jax.ShapeDtypeStruct((num_labels, b_pad), jnp.float32)
    cparams = pltpu.CompilerParams(dimension_semantics=("parallel",))

    if (not training) or dropout_p <= 0.0:
        out_t = pl.pallas_call(
            _linear_kernel,
            out_shape=out_shape,
            grid=grid,
            in_specs=[x_spec, w_spec],
            out_specs=o_spec,
            compiler_params=cparams,
        )(x, w)
    else:
        if rng_key is None:
            rng_key = jax.random.PRNGKey(0)
        bits = jax.random.bits(rng_key, (b_pad, H), dtype=jnp.uint32)
        kernel = functools.partial(
            _dropout_linear_kernel,
            thr=_dropout_threshold(dropout_p),
            inv_keep=1.0 / (1.0 - float(dropout_p)))
        out_t = pl.pallas_call(
            kernel,
            out_shape=out_shape,
            grid=grid,
            in_specs=[x_spec, x_spec, w_spec],   # bits tiled exactly like x
            out_specs=o_spec,
            compiler_params=cparams,
        )(x, bits, w)

    # Layout plumbing + bias add on the tiny [B, 2] result (done by XLA; this
    # drops a per-grid-step padded (8,128) bias DMA from the kernel).
    logits_t = out_t[:, :B]                             # [2, B]
    return logits_t.T + bias.astype(jnp.float32)        # [B, 2]


# ----------------------------------------------------------------------------
# Main
# ----------------------------------------------------------------------------
if __name__ == "__main__":
    # Small shapes consistent with the module's forward: hidden_size -> 32,
    # batch -> 2, num_labels -> 2.
    B, H = 2, 32
    p = 0.3

    key = jax.random.PRNGKey(0)
    k_x, k_w, k_b, k_drop = jax.random.split(key, 4)

    pooled_cls = jax.random.normal(k_x, (B, H), dtype=jnp.float32)
    weight = jax.random.normal(k_w, (2, H), dtype=jnp.float32) * 0.02
    bias = jax.random.normal(k_b, (2,), dtype=jnp.float32) * 0.02

    # ---- eval-mode forward (dropout = identity) --------------------------
    logits = primary_encoder_head_forward(pooled_cls, weight, bias,
                                          training=False)
    logits = jax.block_until_ready(logits)
    ref = pooled_cls @ weight.T + bias
    assert logits.shape == (B, 2)
    assert jnp.allclose(logits, ref, atol=1e-5, rtol=1e-5)

    # ---- train-mode forward (integer-threshold dropout mask) -------------
    logits_train = primary_encoder_head_forward(pooled_cls, weight, bias,
                                                training=True, dropout_p=p,
                                                rng_key=k_drop)
    logits_train = jax.block_until_ready(logits_train)

    # Exact reference: regenerate the same mask bits the wrapper used.
    bits_ref = jax.random.bits(k_drop, (B, H), dtype=jnp.uint32)
    mask = jnp.where(bits_ref < jnp.uint32(_dropout_threshold(p)),
                     0.0, 1.0 / (1.0 - p)).astype(jnp.float32)
    ref_train = (pooled_cls * mask) @ weight.T + bias
    assert logits_train.shape == (B, 2)
    assert jnp.allclose(logits_train, ref_train, atol=1e-4, rtol=1e-4)

    print("KERNEL_OK")
</pallas_src>

<mosaic_0001>
module attributes {stable_mosaic.version = 11 : i64} {
  func.func @_linear_kernel(%arg0: i32, %arg1: memref<2x32xf32, #tpu.memory_space<vmem>>, %arg2: memref<2x32xf32, #tpu.memory_space<vmem>>, %arg3: memref<2x2xf32, #tpu.memory_space<vmem>>) attributes {dimension_semantics = [#tpu.dimension_semantics<parallel>], iteration_bounds = array<i64: 1>, scalar_prefetch = 0 : i64, scratch_operands = 0 : i64, tpu.core_type = #tpu.core_type<tc>, window_params = [{transform_indices = @transform_0, window_bounds = array<i64: 2, 32>}, {pipeline_mode = #tpu.pipeline_mode<synchronous>, transform_indices = @transform_1, window_bounds = array<i64: 2, 32>}, {transform_indices = @transform_2, window_bounds = array<i64: 2, 2>}]} {
    %c0 = arith.constant 0 : index
    %c0_0 = arith.constant 0 : index
    %0 = vector.load %arg2[%c0, %c0_0] : memref<2x32xf32, #tpu.memory_space<vmem>>, vector<2x32xf32>
    %c0_1 = arith.constant 0 : index
    %c0_2 = arith.constant 0 : index
    %1 = vector.load %arg1[%c0_1, %c0_2] : memref<2x32xf32, #tpu.memory_space<vmem>>, vector<2x32xf32>
    %cst = arith.constant dense<0.000000e+00> : vector<2x2xf32>
    %2 = tpu.matmul %0, %1, %cst {dimension_numbers = #tpu.dot_dimension_numbers<[1], [1], [0], [0], [0, 0, 1, 0], [], []>} : vector<2x32xf32>, vector<2x32xf32>, vector<2x2xf32> -> vector<2x2xf32>
    %c0_3 = arith.constant 0 : index
    %c0_4 = arith.constant 0 : index
    %3 = vector.load %arg3[%c0_3, %c0_4] : memref<2x2xf32, #tpu.memory_space<vmem>>, vector<2x2xf32>
    tpu.vector_store %arg3[%c0_3, %c0_4], %2 {strides = array<i32>} : memref<2x2xf32, #tpu.memory_space<vmem>>, vector<2x2xf32>,
    return
  }
  func.func @transform_0(%arg0: i32) -> (i32, i32) {
    %c0_i32 = arith.constant 0 : i32
    %c0_i32_0 = arith.constant 0 : i32
    return %arg0, %c0_i32 : i32, i32
  }
  func.func @transform_1(%arg0: i32) -> (i32, i32) {
    %c0_i32 = arith.constant 0 : i32
    %c0_i32_0 = arith.constant 0 : i32
    %c0_i32_1 = arith.constant 0 : i32
    return %c0_i32, %c0_i32_0 : i32, i32
  }
  func.func @transform_2(%arg0: i32) -> (i32, i32) {
    %c0_i32 = arith.constant 0 : i32
    %c0_i32_0 = arith.constant 0 : i32
    return %c0_i32, %arg0 : i32, i32
  }
}

</mosaic_0001>

<llo_original>
// kernel: tpu_custom_call.1
$region0: #{tpu_custom_call.1}
  #allocation0 [shape = 'u32[]', space=smem, size = 0x4, offset = 0x4, fixed_abs, tag = 'smem constant byte address 0x4 - core index']
  #allocation1 [shape = 'u32[72,128]{1,0:T(1,128)}', space=vmem, size = 0x9000, scoped, tag = 'internal scratch']
  %s0 = inlined_call_operand.hbm [shape: f32[2,32], index: 0, kind: input, shape index: {}]
  %s1 = inlined_call_operand.hbm [shape: f32[2,32], index: 1, kind: input, shape index: {}]
  %s2 = inlined_call_operand.hbm [shape: f32[2,2], index: 2, kind: output, shape index: {}]
  %s3 = sld [smem:[#allocation0]]
  $region26: #{tpu_custom_call.1} parent=0
    _
  %s5 = ssub.s32 1, %s3
  %s6 = scalar_select 0, %s5, %s3
  $region1: #{tpu_custom_call.1} parent=0
    #allocation2 [shape = 'u8[1024]{0}', space=vmem, size = 0x400, scoped, tag = 'input window, operand 0, single buffered']
    #allocation3 [shape = 's32[1]{0}', space=sflag, size = 0x4, scoped, tag = 'scoped memory for tpu_custom_call.1']
    #allocation4 [shape = 's32[1]{0}', space=sflag, size = 0x4, scoped, tag = 'scoped memory for tpu_custom_call.1']
    #allocation5 [shape = 'u8[1024]{0}', space=vmem, size = 0x400, scoped, tag = 'input window, operand 1, single buffered']
    #allocation6 [shape = 's32[1]{0}', space=sflag, size = 0x4, scoped, tag = 'scoped memory for tpu_custom_call.1']
    #allocation7 [shape = 'u8[1024]{0}', space=vmem, size = 0x400, scoped, tag = 'output window, operand 0, single buffered']
    %7 = vsyncpa [#allocation3], 0
    %8 = vsyncpa [#allocation6], 0
    %9 = vsyncpa [#allocation4], 0
    // Predicated region
    $region2: #{tpu_custom_call.1} parent=1 // pred_check
      _
    $region3: #{tpu_custom_call.1} parent=1 // pred_check_branch
      %11 = sbr.rel (0) target = $region5
    $region4: #{tpu_custom_call.1} parent=1 // pred_region
      %13 = vsyncadd [#allocation3], 0
      %s15 = sshll.u32 %s0, 4
      %s16 = int_to_ptr.hbm [resolvable:$true] %s15
      %s17 = sshll.u32 [#allocation2], 4
      %s18 = int_to_ptr.vmem [resolvable:$true] %s17
      %20 = dma.hbm_to_vmem [thread:$0]  %s16, 32, %s18, [#allocation3]
    $region5: #{tpu_custom_call.1} parent=1 // pred_fallthru
      _
    // Predicated region
    $region6: #{tpu_custom_call.1} parent=1 // pred_check
      _
    $region7: #{tpu_custom_call.1} parent=1 // pred_check_branch
      %22 = sbr.rel (0) target = $region9
    $region8: #{tpu_custom_call.1} parent=1 // pred_region
      %24 = vsyncadd [#allocation6], 0
      %s26 = sshll.u32 %s1, 4
      %s27 = int_to_ptr.hbm [resolvable:$true] %s26
      %s28 = sshll.u32 [#allocation5], 4
      %s29 = int_to_ptr.vmem [resolvable:$true] %s28
      %31 = dma.hbm_to_vmem [thread:$0]  %s27, 32, %s29, [#allocation6]
    $region9: #{tpu_custom_call.1} parent=1 // pred_fallthru
      _
    // Predicated region
    $region10: #{tpu_custom_call.1} parent=1 // pred_check
      _
    $region11: #{tpu_custom_call.1} parent=1 // pred_check_branch
      %33 = sbr.rel (0) target = $region13
    $region12: #{tpu_custom_call.1} parent=1 // pred_region
      %35 = dma.done [#allocation3], 32
    $region13: #{tpu_custom_call.1} parent=1 // pred_fallthru
      _
    // Predicated region
    $region14: #{tpu_custom_call.1} parent=1 // pred_check
      _
    $region15: #{tpu_custom_call.1} parent=1 // pred_check_branch
      %37 = sbr.rel (0) target = $region17
    $region16: #{tpu_custom_call.1} parent=1 // pred_region
      %39 = dma.done [#allocation6], 32
    $region17: #{tpu_custom_call.1} parent=1 // pred_fallthru
      _
    %v40 = vld [vmem:[#allocation5] sm:$0x3]
    %v41 = vld [vmem:[#allocation2] sm:$0x3]
    %vm42 = vcmask 261120
    %v44 = vsel %vm42, %v40, 0
    %v47 = vsel %vm42, %v41, 0
    %49 = vmatpush.xpose.msra.mxu0 0.0
    %50 = vmatpush.xpose.msra.mxu0 0.0
    %51 = vmatpush.xpose.msra.mxu0 0.0
    %52 = vmatpush.xpose.msra.mxu0 0.0
    %53 = vmatpush.xpose.msra.mxu0 0.0
    %54 = vmatpush.xpose.msra.mxu0 0.0
    %55 = vmatpush.xpose.msra.mxu0 0.0
    %56 = vmatpush.xpose.msra.mxu0 0.0
    %57 = vmatpush.xpose.msra.mxu0 0.0
    %58 = vmatpush.xpose.msra.mxu0 0.0
    %59 = vmatpush.xpose.msra.mxu0 0.0
    %60 = vmatpush.xpose.msra.mxu0 0.0
    %61 = vmatpush.xpose.msra.mxu0 0.0
    %62 = vmatpush.xpose.msra.mxu0 0.0
    %63 = vmatpush.xpose.msra.mxu0 0.0
    %64 = vmatpush.xpose.msra.mxu0 %v47
    %65 = vmatmul.f32.gmra.mxu0 %v44
    %v66 = vpop.f32.mrf.mxu0
    %v67 = vadd.f32 0.0, %v66
    %68 = vdwg.mxu0
    %vm69 = vcmask 9216
    %70 = vst.msk [vmem:[#allocation7] sm:$0x3] %vm69, %v67
    // Predicated region
    $region18: #{tpu_custom_call.1} parent=1 // pred_check
      _
    $region19: #{tpu_custom_call.1} parent=1 // pred_check_branch
      %72 = sbr.rel (0) target = $region21
    $region20: #{tpu_custom_call.1} parent=1 // pred_region
      %74 = vsyncadd [#allocation4], 0
      %s76 = sshll.u32 [#allocation7], 4
      %s77 = int_to_ptr.vmem [resolvable:$true] %s76
      %s78 = sshll.u32 %s2, 4
      %s79 = int_to_ptr.hbm [resolvable:$true] %s78
      %81 = dma.vmem_to_hbm [thread:$0]  %s77, 32, %s79, [#allocation4]
    $region21: #{tpu_custom_call.1} parent=1 // pred_fallthru
      _
    // Predicated region
    $region22: #{tpu_custom_call.1} parent=1 // pred_check
      _
    $region23: #{tpu_custom_call.1} parent=1 // pred_check_branch
      %83 = sbr.rel (0) target = $region25
    $region24: #{tpu_custom_call.1} parent=1 // pred_region
      %85 = dma.done [#allocation4], 32
    $region25: #{tpu_custom_call.1} parent=1 // pred_fallthru
      _
    %86 = vsyncpa [#allocation3], 1
    %87 = vsyncpa [#allocation6], 1
    %88 = vsyncpa [#allocation4], 1

</llo_original>
